<compile_context>
chip_gen: v5e
topology: v5e:2x2
jax: 0.10.0
libtpu: 0.0.40
codegen_flags: <defaults>
</compile_context>

<pallas_src>
import jax
import jax.numpy as jnp
from jax.experimental import pallas as pl
from jax.experimental.pallas import tpu as pltpu


def _round_up(x, m):
    return ((x + m - 1) // m) * m


def stacked_branch_kernel(u_ref, w1_ref, b1_ref, w2_ref, b2_ref, o_ref):
    # In-kernel operand cast (free VPU work under the MXU); no wrapper-side
    # extra HBM pass over u.
    u = u_ref[...].astype(w1_ref.dtype)
    # Stage 1: (bt, D) @ (D, K*H), f32 accumulation; bias + tanh in f32
    # (EUP transcendental; f32 elementwise is the fast path on all gens).
    # Cast once to the stage-2 operand dtype so only that copy stays live.
    h = jnp.tanh(
        jnp.dot(u, w1_ref[...], preferred_element_type=jnp.float32) + b1_ref[...]
    ).astype(w2_ref.dtype)
    # Stage 2: block-diagonal (K*H, K) -> narrow (bt, K) output.
    out = jnp.dot(h, w2_ref[...], preferred_element_type=jnp.float32) + b2_ref[...]
    o_ref[...] = out.astype(o_ref.dtype)


def pack_params(w1, b1, w2, b2, compute_dtype=jnp.float32):
    """Pack per-branch parameters ONCE (hoisted out of the per-call hot path).

    w1: (K, D, H), b1: (K, H), w2: (K, H), b2: (K,)
    Returns:
      w1_flat (D, K*H)  in compute_dtype
      b1_flat (1, K*H)  f32
      w2_bd   (K*H, K)  block-diagonal, compute_dtype
      b2_row  (1, K)    f32
    """
    K, D, H = w1.shape
    KH = K * H
    w1_flat = jnp.transpose(w1, (1, 0, 2)).reshape(D, KH).astype(compute_dtype)
    b1_flat = b1.reshape(1, KH).astype(jnp.float32)
    eye = jnp.eye(K, dtype=jnp.float32)
    w2_bd = (w2.astype(jnp.float32)[:, :, None] * eye[:, None, :]).reshape(KH, K)
    w2_bd = w2_bd.astype(compute_dtype)
    b2_row = b2.reshape(1, K).astype(jnp.float32)
    return w1_flat, b1_flat, w2_bd, b2_row


@jax.jit
def stacked_branch_forward(u, w1_flat, b1_flat, w2_bd, b2_row):
    """u: (B, D) -> (B, K), matching torch.stack of branch outputs."""
    B, D = u.shape
    KH = w1_flat.shape[1]
    K = w2_bd.shape[1]
    cdt = w1_flat.dtype
    cbytes = jnp.dtype(cdt).itemsize
    ubytes = jnp.dtype(u.dtype).itemsize

    # ---- generation-aware VMEM budget ------------------------------------
    try:
        info = pltpu.get_tpu_info()
        vmem_cap = int(getattr(info, "vmem_capacity_bytes", 64 * 1024 * 1024))
    except Exception:
        vmem_cap = 64 * 1024 * 1024          # conservative: v7x per-TC VMEM
    vmem_budget = (vmem_cap * 7) // 8        # leave runtime-reserved headroom

    # Resident weights are single-buffered (Buffered(1)) -> x1, not x2.
    resident = (D * KH + KH * K) * cbytes + (KH + K) * 4
    # Per batch-row VMEM: double-buffered u tile + double-buffered out tile
    # + f32 tanh intermediate + its compute-dtype copy (conservative).
    per_row = 2 * D * ubytes + 2 * K * 4 + KH * (4 + cbytes)
    headroom = 2 * 1024 * 1024               # compiler-internal scratch
    usable = max(vmem_budget - resident - headroom, 0)
    bt_cap = max(8, min(1024, (usable // max(per_row, 1)) // 8 * 8))

    # ---- batch tiling: balanced tiles, >=2 steps when splittable ----------
    n_tiles = max(pl.cdiv(B, bt_cap), 2 if B > 8 else 1)
    bt = _round_up(pl.cdiv(B, n_tiles), 8)
    B_pad = n_tiles * bt
    if B_pad != B:
        u = jnp.pad(u, ((0, B_pad - B), (0, 0)))

    vmem_limit = int(
        min(max(resident + bt * per_row + headroom, 4 * 1024 * 1024), vmem_budget)
    )

    cost = pl.CostEstimate(
        flops=2 * B_pad * D * KH + 2 * B_pad * KH * K,
        transcendentals=B_pad * KH,
        bytes_accessed=(
            B_pad * D * ubytes
            + (D * KH + KH * K) * cbytes
            + (KH + K) * 4
            + B_pad * K * 4
        ),
    )

    def resident_spec(shape):
        return pl.BlockSpec(shape, lambda b: (0, 0), pipeline_mode=pl.Buffered(1))

    out = pl.pallas_call(
        stacked_branch_kernel,
        out_shape=jax.ShapeDtypeStruct((B_pad, K), jnp.float32),
        grid=(n_tiles,),
        in_specs=[
            pl.BlockSpec((bt, D), lambda b: (b, 0)),   # u tile (double-buffered)
            resident_spec((D, KH)),                    # W1 packed (resident, x1)
            resident_spec((1, KH)),                    # b1 (resident, x1)
            resident_spec((KH, K)),                    # W2 block-diag (resident, x1)
            resident_spec((1, K)),                     # b2 (resident, x1)
        ],
        out_specs=pl.BlockSpec((bt, K), lambda b: (b, 0)),
        compiler_params=pltpu.CompilerParams(
            dimension_semantics=("parallel",),         # megacore sharding on v7x
            vmem_limit_bytes=vmem_limit,
        ),
        cost_estimate=cost,
    )(u, w1_flat, b1_flat, w2_bd, b2_row)

    return out[:B] if B_pad != B else out


def reference_forward(u, w1, b1, w2, b2):
    """Pure-JAX reference mirroring the PyTorch loop over branches."""
    cols = []
    for k in range(w1.shape[0]):
        h = jnp.tanh(u @ w1[k] + b1[k])          # (B, H)
        cols.append(h @ w2[k] + b2[k])           # (B,)
    return jnp.stack(cols, axis=1)               # (B, K)


if __name__ == "__main__":
    # Small shapes consistent with the module's forward.
    batch, input_dim, hidden_dim, latent_dim = 8, 16, 32, 4

    key = jax.random.PRNGKey(0)
    ku, k1, kb1, k2, kb2 = jax.random.split(key, 5)

    u = jax.random.normal(ku, (batch, input_dim), dtype=jnp.float32)
    # nn.Linear weights stored transposed as (in, out) per branch.
    w1 = jax.random.normal(k1, (latent_dim, input_dim, hidden_dim), dtype=jnp.float32) * 0.1
    b1 = jax.random.normal(kb1, (latent_dim, hidden_dim), dtype=jnp.float32) * 0.1
    w2 = jax.random.normal(k2, (latent_dim, hidden_dim), dtype=jnp.float32) * 0.1
    b2 = jax.random.normal(kb2, (latent_dim,), dtype=jnp.float32) * 0.1

    ref = reference_forward(u, w1, b1, w2, b2)

    # f32 operand path (MXU default precision; loosened slightly vs bitwise).
    packed_f32 = pack_params(w1, b1, w2, b2, compute_dtype=jnp.float32)
    out_f32 = jax.block_until_ready(stacked_branch_forward(u, *packed_f32))
    assert out_f32.shape == (batch, latent_dim)
    assert jnp.allclose(out_f32, ref, atol=2e-5, rtol=2e-5)

    # bf16 MXU operand path (v6e/v7x fast path): f32 accumulation + f32 tanh/bias.
    packed_bf16 = pack_params(w1, b1, w2, b2, compute_dtype=jnp.bfloat16)
    out_bf16 = jax.block_until_ready(stacked_branch_forward(u, *packed_bf16))
    assert out_bf16.shape == (batch, latent_dim)
    assert jnp.allclose(out_bf16, ref, atol=5e-2, rtol=5e-2)

    print("KERNEL_OK")
</pallas_src>

<mosaic_0001>
module attributes {stable_mosaic.version = 11 : i64} {
  func.func @stacked_branch_kernel(%arg0: i32, %arg1: memref<8x16xf32, #tpu.memory_space<vmem>>, %arg2: memref<16x128xf32, #tpu.memory_space<vmem>>, %arg3: memref<1x128xf32, #tpu.memory_space<vmem>>, %arg4: memref<128x4xf32, #tpu.memory_space<vmem>>, %arg5: memref<1x4xf32, #tpu.memory_space<vmem>>, %arg6: memref<8x4xf32, #tpu.memory_space<vmem>>) attributes {dimension_semantics = [#tpu.dimension_semantics<parallel>], iteration_bounds = array<i64: 1>, scalar_prefetch = 0 : i64, scratch_operands = 0 : i64, tpu.core_type = #tpu.core_type<tc>, window_params = [{transform_indices = @transform_0, window_bounds = array<i64: 8, 16>}, {pipeline_mode = #tpu.pipeline_mode<synchronous>, transform_indices = @transform_1, window_bounds = array<i64: 16, 128>}, {pipeline_mode = #tpu.pipeline_mode<synchronous>, transform_indices = @transform_2, window_bounds = array<i64: 1, 128>}, {pipeline_mode = #tpu.pipeline_mode<synchronous>, transform_indices = @transform_3, window_bounds = array<i64: 128, 4>}, {pipeline_mode = #tpu.pipeline_mode<synchronous>, transform_indices = @transform_4, window_bounds = array<i64: 1, 4>}, {transform_indices = @transform_5, window_bounds = array<i64: 8, 4>}]} {
    %c0 = arith.constant 0 : index
    %c0_0 = arith.constant 0 : index
    %0 = vector.load %arg1[%c0, %c0_0] : memref<8x16xf32, #tpu.memory_space<vmem>>, vector<8x16xf32>
    %c0_1 = arith.constant 0 : index
    %c0_2 = arith.constant 0 : index
    %1 = vector.load %arg2[%c0_1, %c0_2] : memref<16x128xf32, #tpu.memory_space<vmem>>, vector<16x128xf32>
    %cst = arith.constant dense<0.000000e+00> : vector<8x128xf32>
    %2 = tpu.matmul %0, %1, %cst {dimension_numbers = #tpu.dot_dimension_numbers<[1], [0], [0], [1], [0, 0, 1, 1], [], []>} : vector<8x16xf32>, vector<16x128xf32>, vector<8x128xf32> -> vector<8x128xf32>
    %c0_3 = arith.constant 0 : index
    %c0_4 = arith.constant 0 : index
    %3 = vector.load %arg3[%c0_3, %c0_4] : memref<1x128xf32, #tpu.memory_space<vmem>>, vector<1x128xf32>
    %4 = vector.broadcast %3 : vector<1x128xf32> to vector<8x128xf32>
    %5 = arith.addf %2, %4 : vector<8x128xf32>
    %6 = math.tanh %5 : vector<8x128xf32>
    %c0_5 = arith.constant 0 : index
    %c0_6 = arith.constant 0 : index
    %7 = vector.load %arg4[%c0_5, %c0_6] : memref<128x4xf32, #tpu.memory_space<vmem>>, vector<128x4xf32>
    %cst_7 = arith.constant dense<0.000000e+00> : vector<8x4xf32>
    %8 = tpu.matmul %6, %7, %cst_7 {dimension_numbers = #tpu.dot_dimension_numbers<[1], [0], [0], [1], [0, 0, 1, 1], [], []>} : vector<8x128xf32>, vector<128x4xf32>, vector<8x4xf32> -> vector<8x4xf32>
    %c0_8 = arith.constant 0 : index
    %c0_9 = arith.constant 0 : index
    %9 = vector.load %arg5[%c0_8, %c0_9] : memref<1x4xf32, #tpu.memory_space<vmem>>, vector<1x4xf32>
    %10 = vector.broadcast %9 : vector<1x4xf32> to vector<8x4xf32>
    %11 = arith.addf %8, %10 : vector<8x4xf32>
    %c0_10 = arith.constant 0 : index
    %c0_11 = arith.constant 0 : index
    %12 = vector.load %arg6[%c0_10, %c0_11] : memref<8x4xf32, #tpu.memory_space<vmem>>, vector<8x4xf32>
    tpu.vector_store %arg6[%c0_10, %c0_11], %11 {strides = array<i32>} : memref<8x4xf32, #tpu.memory_space<vmem>>, vector<8x4xf32>,
    return
  }
  func.func @transform_0(%arg0: i32) -> (i32, i32) {
    %c0_i32 = arith.constant 0 : i32
    %c0_i32_0 = arith.constant 0 : i32
    return %arg0, %c0_i32 : i32, i32
  }
  func.func @transform_1(%arg0: i32) -> (i32, i32) {
    %c0_i32 = arith.constant 0 : i32
    %c0_i32_0 = arith.constant 0 : i32
    %c0_i32_1 = arith.constant 0 : i32
    return %c0_i32, %c0_i32_0 : i32, i32
  }
  func.func @transform_2(%arg0: i32) -> (i32, i32) {
    %c0_i32 = arith.constant 0 : i32
    %c0_i32_0 = arith.constant 0 : i32
    %c0_i32_1 = arith.constant 0 : i32
    return %c0_i32, %c0_i32_0 : i32, i32
  }
  func.func @transform_3(%arg0: i32) -> (i32, i32) {
    %c0_i32 = arith.constant 0 : i32
    %c0_i32_0 = arith.constant 0 : i32
    %c0_i32_1 = arith.constant 0 : i32
    return %c0_i32, %c0_i32_0 : i32, i32
  }
  func.func @transform_4(%arg0: i32) -> (i32, i32) {
    %c0_i32 = arith.constant 0 : i32
    %c0_i32_0 = arith.constant 0 : i32
    %c0_i32_1 = arith.constant 0 : i32
    return %c0_i32, %c0_i32_0 : i32, i32
  }
  func.func @transform_5(%arg0: i32) -> (i32, i32) {
    %c0_i32 = arith.constant 0 : i32
    %c0_i32_0 = arith.constant 0 : i32
    return %arg0, %c0_i32 : i32, i32
  }
}

</mosaic_0001>

<llo_original>
// kernel: stacked_branch_forward.1
$region0: #{stacked_branch_forward.1}
  #allocation0 [shape = 'u32[]', space=smem, size = 0x4, offset = 0x4, fixed_abs, tag = 'smem constant byte address 0x4 - core index']
  #allocation1 [shape = 'u32[72,128]{1,0:T(1,128)}', space=vmem, size = 0x9000, scoped, tag = 'internal scratch']
  %s0 = inlined_call_operand.vmem [shape: f32[8,16], index: 0, kind: input, shape index: {}]
  %s1 = inlined_call_operand.vmem [shape: f32[16,128], index: 1, kind: input, shape index: {}]
  %s2 = inlined_call_operand.vmem [shape: f32[1,128], index: 2, kind: input, shape index: {}]
  %s3 = inlined_call_operand.vmem [shape: f32[128,4], index: 3, kind: input, shape index: {}]
  %s4 = inlined_call_operand.vmem [shape: f32[1,4], index: 4, kind: input, shape index: {}]
  %s5 = inlined_call_operand.vmem [shape: f32[8,4], index: 5, kind: output, shape index: {}]
  %s6 = sld [smem:[#allocation0]]
  $region30: #{stacked_branch_forward.1} parent=0
    _
  %s8 = ssub.s32 1, %s6
  %s9 = scalar_select 0, %s8, %s6
  // Predicated region
  $region2: #{stacked_branch_forward.1} parent=0 // pred_check
    _
  $region3: #{stacked_branch_forward.1} parent=0 // pred_check_branch
    %11 = sbr.rel (0) target = $region5
  $region4: #{stacked_branch_forward.1} parent=0 // pred_region
    _
  $region5: #{stacked_branch_forward.1} parent=0 // pred_fallthru
    _
  // Predicated region
  $region6: #{stacked_branch_forward.1} parent=0 // pred_check
    _
  $region7: #{stacked_branch_forward.1} parent=0 // pred_check_branch
    %13 = sbr.rel (0) target = $region9
  $region8: #{stacked_branch_forward.1} parent=0 // pred_region
    _
  $region9: #{stacked_branch_forward.1} parent=0 // pred_fallthru
    _
  // Predicated region
  $region10: #{stacked_branch_forward.1} parent=0 // pred_check
    _
  $region11: #{stacked_branch_forward.1} parent=0 // pred_check_branch
    %15 = sbr.rel (0) target = $region13
  $region12: #{stacked_branch_forward.1} parent=0 // pred_region
    _
  $region13: #{stacked_branch_forward.1} parent=0 // pred_fallthru
    _
  // Predicated region
  $region14: #{stacked_branch_forward.1} parent=0 // pred_check
    _
  $region15: #{stacked_branch_forward.1} parent=0 // pred_check_branch
    %17 = sbr.rel (0) target = $region17
  $region16: #{stacked_branch_forward.1} parent=0 // pred_region
    _
  $region17: #{stacked_branch_forward.1} parent=0 // pred_fallthru
    _
  // Predicated region
  $region18: #{stacked_branch_forward.1} parent=0 // pred_check
    _
  $region19: #{stacked_branch_forward.1} parent=0 // pred_check_branch
    %19 = sbr.rel (0) target = $region21
  $region20: #{stacked_branch_forward.1} parent=0 // pred_region
    _
  $region21: #{stacked_branch_forward.1} parent=0 // pred_fallthru
    _
  %v20 = vld [vmem:[%s0] sm:$0xff]
  %v21 = vld [vmem:[%s1] sm:$0xff]
  %v22 = vld [vmem:[%s1 + $0x8] sm:$0xff]
  %v23 = vld [vmem:[%s2] sm:$0x1]
  %v25 = vperm.slane %v23, 0
  %vm27 = vcmask 130048
  %v29 = vsel %vm27, %v20, 0
  %31 = vmatpush.msra.mxu0 0.0
  %32 = vmatpush.msra.mxu0 0.0
  %33 = vmatpush.msra.mxu0 0.0
  %34 = vmatpush.msra.mxu0 0.0
  %35 = vmatpush.msra.mxu0 0.0
  %36 = vmatpush.msra.mxu0 0.0
  %37 = vmatpush.msra.mxu0 0.0
  %38 = vmatpush.msra.mxu0 0.0
  %39 = vmatpush.msra.mxu0 0.0
  %40 = vmatpush.msra.mxu0 0.0
  %41 = vmatpush.msra.mxu0 0.0
  %42 = vmatpush.msra.mxu0 0.0
  %43 = vmatpush.msra.mxu0 0.0
  %44 = vmatpush.msra.mxu0 0.0
  %45 = vmatpush.msra.mxu0 %v22
  %46 = vmatpush.msra.mxu0 %v21
  %47 = vmatmul.f32.gmra.mxu0 %v29
  %v48 = vpop.f32.mrf.mxu0
  %v49 = vadd.f32 %v25, %v48
  %50 = vdwg.mxu0
  %v51 = vtanh.pop %v49
  %v52 = vld [vmem:[%s3] sm:$0xff]
  %v53 = vld [vmem:[%s3 + $0x8] sm:$0xff]
  %v54 = vld [vmem:[%s3 + $0x10] sm:$0xff]
  %v55 = vld [vmem:[%s3 + $0x18] sm:$0xff]
  %v56 = vld [vmem:[%s3 + $0x20] sm:$0xff]
  %v57 = vld [vmem:[%s3 + $0x28] sm:$0xff]
  %v58 = vld [vmem:[%s3 + $0x30] sm:$0xff]
  %v59 = vld [vmem:[%s3 + $0x38] sm:$0xff]
  %v60 = vld [vmem:[%s3 + $0x40] sm:$0xff]
  %v61 = vld [vmem:[%s3 + $0x48] sm:$0xff]
  %v62 = vld [vmem:[%s3 + $0x50] sm:$0xff]
  %v63 = vld [vmem:[%s3 + $0x58] sm:$0xff]
  %v64 = vld [vmem:[%s3 + $0x60] sm:$0xff]
  %v65 = vld [vmem:[%s3 + $0x68] sm:$0xff]
  %v66 = vld [vmem:[%s3 + $0x70] sm:$0xff]
  %v67 = vld [vmem:[%s3 + $0x78] sm:$0xff]
  %v68 = vld [vmem:[%s4] sm:$0x1]
  %v70 = vperm.slane %v68, 0
  %72 = vmatpush.msra.mxu0 %v67
  %73 = vmatpush.msra.mxu0 %v66
  %74 = vmatpush.msra.mxu0 %v65
  %75 = vmatpush.msra.mxu0 %v64
  %76 = vmatpush.msra.mxu0 %v63
  %77 = vmatpush.msra.mxu0 %v62
  %78 = vmatpush.msra.mxu0 %v61
  %79 = vmatpush.msra.mxu0 %v60
  %80 = vmatpush.msra.mxu0 %v59
  %81 = vmatpush.msra.mxu0 %v58
  %82 = vmatpush.msra.mxu0 %v57
  %83 = vmatpush.msra.mxu0 %v56
  %84 = vmatpush.msra.mxu0 %v55
  %85 = vmatpush.msra.mxu0 %v54
  %86 = vmatpush.msra.mxu0 %v53
  %87 = vmatpush.msra.mxu0 %v52
  %88 = vmatmul.f32.gmra.mxu0 %v51
  %v89 = vpop.f32.mrf.mxu0
  %v90 = vadd.f32 %v70, %v89
  %91 = vdwg.mxu0
  %vm92 = vcmask 31744
  %93 = vst.msk [vmem:[%s5] sm:$0xff] %vm92, %v90
  // Predicated region
  $region22: #{stacked_branch_forward.1} parent=0 // pred_check
    _
  $region23: #{stacked_branch_forward.1} parent=0 // pred_check_branch
    %95 = sbr.rel (0) target = $region25
  $region24: #{stacked_branch_forward.1} parent=0 // pred_region
    _
  $region25: #{stacked_branch_forward.1} parent=0 // pred_fallthru
    _
  // Predicated region
  $region26: #{stacked_branch_forward.1} parent=0 // pred_check
    _
  $region27: #{stacked_branch_forward.1} parent=0 // pred_check_branch
    %97 = sbr.rel (0) target = $region29
  $region28: #{stacked_branch_forward.1} parent=0 // pred_region
    _
  $region29: #{stacked_branch_forward.1} parent=0 // pred_fallthru
    _

</llo_original>
